<compile_context>
chip_gen: v5e
topology: v5e:2x2
jax: 0.10.0
libtpu: 0.0.40
codegen_flags: <defaults>
</compile_context>

<pallas_src>
import jax
import jax.numpy as jnp
from jax.experimental import pallas as pl
from jax.experimental.pallas import tpu as pltpu


def identity_kernel(x_ref, o_ref):
    # Intentionally empty: the output HBM buffer aliases the input HBM buffer
    # (input_output_aliases={0: 0}), so the data is already "in" the output.
    # No loads, no stores, no DMA.
    del x_ref, o_ref


def _identity_pallas(x):
    return pl.pallas_call(
        identity_kernel,
        out_shape=jax.ShapeDtypeStruct(x.shape, x.dtype),
        # Leave both operands in place (HBM); no grid, no auto-pipelining.
        in_specs=[pl.BlockSpec(memory_space=pl.ANY)],
        out_specs=pl.BlockSpec(memory_space=pl.ANY),
        input_output_aliases={0: 0},  # output buffer == input buffer
        compiler_params=pltpu.CompilerParams(has_side_effects=True),
    )(x)


# Donate the input so the alias actually takes effect (no defensive copy).
identity = jax.jit(_identity_pallas, donate_argnums=0)


if __name__ == "__main__":
    key = jax.random.PRNGKey(0)
    shape = (2, 4, 16, 16)
    x = jax.random.normal(key, shape, dtype=jnp.float32)

    y = identity(x)
    jax.block_until_ready(y)

    # x was donated; re-derive the expected values from the same key.
    x_expected = jax.random.normal(key, shape, dtype=jnp.float32)
    assert y.shape == shape
    assert y.dtype == jnp.float32
    assert bool(jnp.all(y == x_expected))

    # Also exercise a shape whose element count is NOT a multiple of 128
    # (the old fallback hazard); the zero-copy path handles it identically.
    key2 = jax.random.PRNGKey(1)
    x2 = jax.random.normal(key2, (3, 5, 7), dtype=jnp.float32)
    y2 = identity(x2)
    jax.block_until_ready(y2)
    x2_expected = jax.random.normal(key2, (3, 5, 7), dtype=jnp.float32)
    assert y2.shape == (3, 5, 7)
    assert bool(jnp.all(y2 == x2_expected))

    print("KERNEL_OK")
</pallas_src>

<mosaic_0001>
module attributes {stable_mosaic.version = 11 : i64} {
  func.func @identity_kernel(%arg0: memref<2x4x16x16xf32, #tpu.memory_space<any>>, %arg1: memref<2x4x16x16xf32, #tpu.memory_space<any>>) attributes {dimension_semantics = [], scalar_prefetch = 0 : i64, scratch_operands = 0 : i64, tpu.core_type = #tpu.core_type<tc>} {
    return
  }
}

</mosaic_0001>

<llo_original>
// kernel: _identity_pallas.1
$region0: #{_identity_pallas.1}
  #allocation0 [shape = 'u32[]', space=smem, size = 0x4, offset = 0x4, fixed_abs, tag = 'smem constant byte address 0x4 - core index']
  #allocation1 [shape = 'u32[72,128]{1,0:T(1,128)}', space=vmem, size = 0x9000, scoped, tag = 'internal scratch']
  %s0 = inlined_call_operand.hbm [shape: f32[2,4,16,16], index: 0, kind: input, shape index: {}, may-alias: {0,1}]
  %s1 = inlined_call_operand.hbm [shape: f32[2,4,16,16], index: 1, kind: output, shape index: {}, may-alias: {0,1}]
  %s2 = sld [smem:[#allocation0]]
  $region2: #{_identity_pallas.1} parent=0
    _
  %s4 = ssub.s32 1, %s2
  %s5 = scalar_select 0, %s4, %s2

</llo_original>
